<compile_context>
chip_gen: v7x
topology: tpu7x:2x2x1
jax: 0.10.0
libtpu: 0.0.40
codegen_flags: <defaults>
</compile_context>

<pallas_src>
import numpy as np
import jax
import jax.numpy as jnp
from jax import lax
from jax.experimental import pallas as pl
from jax.experimental.pallas import tpu as pltpu


def _round_up(x, m):
    return ((x + m - 1) // m) * m


def edge_layer_kernel(kind_ref, a_ref, ex_ref, rel_ref, w_ref, b_ref,
                      o_ref, l_sc):
    """Grid = (node_block, edge_tile). o_ref is the resident per-block accumulator."""
    t = pl.program_id(1)

    @pl.when(t == 0)
    def _init():
        o_ref[...] = jnp.zeros_like(o_ref)
        l_sc[...] = jnp.zeros_like(l_sc)

    a = a_ref[...]                                   # [TN, TE] bf16, exact 0/1
    ex = ex_ref[...]                                 # [TE, 1]  f32, exp(attn - max[dst]), 0 on pads

    # softmax denominator: every edge takes mass regardless of in/out membership
    l_sc[...] += jnp.dot(a, ex.astype(jnp.bfloat16),
                         preferred_element_type=jnp.float32)            # [TN, 1]

    kind = kind_ref[t]                               # 0: w_o, 1: w_i, 2: neither

    @pl.when(kind != 2)
    def _accumulate():
        # per-edge projection; tile is kind-homogeneous (weight picked by index_map)
        h = jnp.dot(rel_ref[...], w_ref[0],
                    preferred_element_type=jnp.float32) + b_ref[0]      # [TE, O] f32
        hs = (ex * h).astype(jnp.bfloat16)                              # [TE, O]
        o_ref[...] += jnp.dot(a, hs, preferred_element_type=jnp.float32)

    @pl.when(t == pl.num_programs(1) - 1)
    def _finalize():
        l = l_sc[...]
        inv = pl.reciprocal(jnp.where(l > 0.0, l, 1.0), approx=True)
        o_ref[...] = o_ref[...] * inv            # isolated nodes: acc == 0 -> stays 0


def edge_layer_forward(ent_emb, rel_emb, src, dst, etype, in_mask, out_mask,
                       params, *, tile_edges=256, tile_nodes=256):
    """Host/XLA glue (gathers, logits, exact node max, edge partition, incidence)
    + one pallas_call + BatchNorm/tanh epilogue."""
    del src  # EdgeLayer.forward never reads source-node embeddings
    N, in_dim = ent_emb.shape
    out_dim = params["w_o"].shape[1]
    D_pad = _round_up(in_dim, 128)
    O_pad = _round_up(out_dim, 128)
    TE = _round_up(tile_edges, 128)
    TN = min(_round_up(tile_nodes, 16), _round_up(N, 16))
    N_pad = _round_up(N, TN)
    NB = N_pad // TN

    dst_np = np.asarray(dst)
    et_np = np.asarray(etype)
    in_m = np.asarray(in_mask).astype(bool)
    out_m = np.asarray(out_mask).astype(bool)

    # edge kind: 0 = out (w_o), 1 = in (w_i, overrides out), 2 = neither (zero proj)
    kind_e = np.where(in_m, 1, np.where(out_m, 0, 2)).astype(np.int32)

    perm_parts, kinds = [], []
    for kc in (0, 1, 2):
        idx = np.nonzero(kind_e == kc)[0]
        if idx.size == 0:
            continue
        n_tiles = -(-idx.size // TE)
        idx = np.concatenate([idx, np.full(n_tiles * TE - idx.size, -1, np.int64)])
        perm_parts.append(idx)
        kinds += [kc] * n_tiles
    perm = np.concatenate(perm_parts)                 # -1 marks padding slots
    tile_kind = jnp.asarray(np.asarray(kinds, np.int32))
    E_pad = int(perm.size)
    T = E_pad // TE
    valid = perm >= 0
    perm_s = np.where(valid, perm, 0)
    dst_perm = dst_np[perm_s]
    et_perm = et_np[perm_s]
    valid_j = jnp.asarray(valid)

    # ---- XLA-side prework (fuses with the gathers it already performs) -------
    # fn.e_dot_v logits, exact per-dst-node max (f32), safe exponentials.
    rel_g = rel_emb[et_perm]                           # [E_pad, in_dim]
    dst_g = ent_emb[dst_perm]                          # [E_pad, in_dim]
    attn = jnp.sum(rel_g * dst_g, axis=-1)             # [E_pad]
    attn_v = jnp.where(valid_j, attn, -jnp.inf)
    node_max = jax.ops.segment_max(attn_v, dst_perm, num_segments=N)
    node_max = jnp.where(jnp.isfinite(node_max), node_max, 0.0)
    ex = jnp.where(valid_j, jnp.exp(attn - node_max[dst_perm]), 0.0)
    ex_col = ex.astype(jnp.float32).reshape(E_pad, 1)  # edge-major f32 column

    # projection input (bf16), padded edge rows zeroed
    rel_pad = jnp.pad(rel_emb, ((0, 0), (0, D_pad - in_dim)))
    rel_e = jnp.where(valid_j[:, None], rel_pad[et_perm], 0.0).astype(jnp.bfloat16)

    # dense dst-incidence matrix, node-major, bf16 (0/1 exact); padded cols = 0
    # (v5e could use int8, v7x fp8-e4m3 for half the DMA; bf16 works everywhere)
    a_bool = (dst_perm[None, :] == np.arange(N_pad)[:, None]) & valid[None, :]
    A = jnp.asarray(a_bool, jnp.bfloat16)              # [N_pad, E_pad]

    def pad_w(w):
        return jnp.pad(w, ((0, D_pad - in_dim), (0, O_pad - out_dim)))

    def pad_b(b):
        return jnp.pad(b, (0, O_pad - out_dim))

    W = jnp.stack([pad_w(params["w_o"]), pad_w(params["w_i"]),
                   jnp.zeros((D_pad, O_pad), jnp.float32)]).astype(jnp.bfloat16)
    B = jnp.stack([pad_b(params["b_o"]), pad_b(params["b_i"]),
                   jnp.zeros((O_pad,), jnp.float32)])[:, None, :]       # [3,1,O_pad] f32

    cost = pl.CostEstimate(
        flops=int(2 * NB * E_pad * D_pad * O_pad        # projection (per node block)
                  + 2 * N_pad * E_pad * O_pad           # aggregation
                  + 2 * N_pad * E_pad),                  # denominator matvec
        transcendentals=int(N_pad),
        bytes_accessed=int(N_pad * E_pad * 2
                           + NB * E_pad * (D_pad * 2 + 4)
                           + T * (D_pad * O_pad * 2 + O_pad * 4)
                           + N_pad * O_pad * 4),
    )

    grid_spec = pltpu.PrefetchScalarGridSpec(
        num_scalar_prefetch=1,
        grid=(NB, T),
        in_specs=[
            pl.BlockSpec((TN, TE), lambda nb, t, kind: (nb, t)),                  # A
            pl.BlockSpec((TE, 1), lambda nb, t, kind: (t, 0)),                    # ex
            pl.BlockSpec((TE, D_pad), lambda nb, t, kind: (t, 0)),                # rel_e
            pl.BlockSpec((1, D_pad, O_pad), lambda nb, t, kind: (kind[t], 0, 0)),  # W
            pl.BlockSpec((1, 1, O_pad), lambda nb, t, kind: (kind[t], 0, 0)),      # B
        ],
        out_specs=pl.BlockSpec((TN, O_pad), lambda nb, t, kind: (nb, 0)),
        scratch_shapes=[pltpu.VMEM((TN, 1), jnp.float32)],   # softmax denominator
    )

    neigh_pad = pl.pallas_call(
        edge_layer_kernel,
        out_shape=jax.ShapeDtypeStruct((N_pad, O_pad), jnp.float32),
        grid_spec=grid_spec,
        compiler_params=pltpu.CompilerParams(
            dimension_semantics=("parallel", "arbitrary"),   # node blocks || , edges = reduction
            vmem_limit_bytes=48 * 1024 * 1024),
        cost_estimate=cost,
    )(tile_kind, A, ex_col, rel_e, W, B)

    # BatchNorm1d (training-mode batch statistics) + tanh epilogue: needs
    # all-node statistics across node blocks, so it stays a tiny XLA op.
    neigh = neigh_pad[:N, :out_dim]
    mean = jnp.mean(neigh, axis=0, keepdims=True)
    var = jnp.mean((neigh - mean) ** 2, axis=0, keepdims=True)
    norm = (neigh - mean) * lax.rsqrt(var + 1e-5)
    return jnp.tanh(norm * params["gamma"] + params["beta"])


def edge_layer_reference(ent_emb, rel_emb, src, dst, etype,
                         in_mask, out_mask, params):
    """Pure-JAX reference (segment ops) of EdgeLayer.forward for checking."""
    del src
    N = ent_emb.shape[0]
    emb = rel_emb[etype]                                  # edge 'emb'
    attn = jnp.sum(emb * ent_emb[dst], axis=-1)           # e_dot_v
    node_max = jax.ops.segment_max(attn, dst, num_segments=N)
    ex = jnp.exp(attn - node_max[dst])
    denom = jax.ops.segment_sum(ex, dst, num_segments=N)[dst]
    alpha = ex / denom
    h_o = emb @ params["w_o"] + params["b_o"]
    h_i = emb @ params["w_i"] + params["b_i"]
    h = jnp.where(in_mask[:, None], h_i,
                  jnp.where(out_mask[:, None], h_o, 0.0))
    h = h * alpha[:, None]
    neigh = jax.ops.segment_sum(h, dst, num_segments=N)
    mean = jnp.mean(neigh, axis=0, keepdims=True)
    var = jnp.mean((neigh - mean) ** 2, axis=0, keepdims=True)
    norm = (neigh - mean) / jnp.sqrt(var + 1e-5)
    return jnp.tanh(norm * params["gamma"] + params["beta"])


if __name__ == "__main__":
    # Small synthetic graph + deterministic parameters.
    N, E, R = 64, 300, 5            # nodes, edges, relation types
    IN_DIM, OUT_DIM = 96, 80        # padded to 128 inside the wrapper

    key = jax.random.PRNGKey(0)
    keys = jax.random.split(key, 9)

    ent_emb = jax.random.normal(keys[0], (N, IN_DIM), jnp.float32)
    rel_emb = jax.random.normal(keys[1], (R, IN_DIM), jnp.float32)
    src = jax.random.randint(keys[2], (E,), 0, N)
    dst = jax.random.randint(keys[3], (E,), 0, N)
    etype = jax.random.randint(keys[4], (E,), 0, R)
    # disjoint in/out edge partition (SEGAT doubles edges: fwd = out, rev = in)
    out_mask = (jnp.arange(E) % 2 == 0)
    in_mask = jnp.logical_not(out_mask)

    xavier_std = (2.0 / (IN_DIM + OUT_DIM)) ** 0.5
    b_bound = 1.0 / (IN_DIM ** 0.5)
    params = {
        "w_o": xavier_std * jax.random.normal(keys[5], (IN_DIM, OUT_DIM), jnp.float32),
        "w_i": xavier_std * jax.random.normal(keys[6], (IN_DIM, OUT_DIM), jnp.float32),
        "b_o": jax.random.uniform(keys[7], (OUT_DIM,), jnp.float32, -b_bound, b_bound),
        "b_i": jax.random.uniform(keys[8], (OUT_DIM,), jnp.float32, -b_bound, b_bound),
        "gamma": jnp.ones((OUT_DIM,), jnp.float32),   # BatchNorm1d weight init
        "beta": jnp.zeros((OUT_DIM,), jnp.float32),   # BatchNorm1d bias init
    }

    # tile_nodes=32 exercises the node-block ("parallel") axis; tile_edges=256
    # gives two kind-homogeneous edge tiles (out / in).
    out = edge_layer_forward(ent_emb, rel_emb, src, dst, etype,
                             in_mask, out_mask, params,
                             tile_edges=256, tile_nodes=32)
    out = jax.block_until_ready(out)

    ref = edge_layer_reference(ent_emb, rel_emb, src, dst, etype,
                               in_mask, out_mask, params)
    assert out.shape == (N, OUT_DIM)
    err = float(jnp.max(jnp.abs(out - ref)))
    # bf16 MXU inputs (projection + aggregation) and approx reciprocal vs an
    # all-f32 reference -> expected max error ~1e-2.
    assert jnp.allclose(out, ref, atol=5e-2, rtol=5e-2), f"max abs err {err}"

    print("KERNEL_OK")
</pallas_src>

<mosaic_0001>
module attributes {stable_mosaic.version = 11 : i64} {
  func.func @edge_layer_kernel(%arg0: i32, %arg1: i32, %arg2: memref<2xi32, #tpu.memory_space<smem>>, %arg3: memref<32x256xbf16, #tpu.memory_space<vmem>>, %arg4: memref<256x1xf32, #tpu.memory_space<vmem>>, %arg5: memref<256x128xbf16, #tpu.memory_space<vmem>>, %arg6: memref<1x128x128xbf16, #tpu.memory_space<vmem>>, %arg7: memref<1x1x128xf32, #tpu.memory_space<vmem>>, %arg8: memref<32x128xf32, #tpu.memory_space<vmem>>, %arg9: memref<32x1xf32, #tpu.memory_space<vmem>>) attributes {dimension_semantics = [#tpu.dimension_semantics<parallel>, #tpu.dimension_semantics<arbitrary>], iteration_bounds = array<i64: 2, 2>, scalar_prefetch = 1 : i64, scratch_operands = 1 : i64, tpu.core_type = #tpu.core_type<tc>, window_params = [{transform_indices = @transform_0, window_bounds = array<i64: 32, 256>}, {transform_indices = @transform_1, window_bounds = array<i64: 256, 1>}, {transform_indices = @transform_2, window_bounds = array<i64: 256, 128>}, {transform_indices = @transform_3, window_bounds = array<i64: 1, 128, 128>}, {transform_indices = @transform_4, window_bounds = array<i64: 1, 1, 128>}, {transform_indices = @transform_5, window_bounds = array<i64: 32, 128>}]} {
    %c0_i32 = arith.constant 0 : i32
    %0 = arith.cmpi eq, %arg1, %c0_i32 : i32
    %1 = arith.extui %0 : i1 to i32
    %c0_i32_0 = arith.constant 0 : i32
    %2 = arith.cmpi ne, %1, %c0_i32_0 : i32
    scf.if %2 {
      %cst_10 = arith.constant 0.000000e+00 : f32
      %18 = vector.broadcast %cst_10 : f32 to vector<32x128xf32>
      %c0_11 = arith.constant 0 : index
      %c0_12 = arith.constant 0 : index
      %19 = vector.load %arg8[%c0_11, %c0_12] : memref<32x128xf32, #tpu.memory_space<vmem>>, vector<32x128xf32>
      tpu.vector_store %arg8[%c0_11, %c0_12], %18 {strides = array<i32>} : memref<32x128xf32, #tpu.memory_space<vmem>>, vector<32x128xf32>,
      %cst_13 = arith.constant 0.000000e+00 : f32
      %20 = vector.broadcast %cst_13 : f32 to vector<32x1xf32>
      %c0_14 = arith.constant 0 : index
      %c0_15 = arith.constant 0 : index
      %21 = vector.load %arg9[%c0_14, %c0_15] : memref<32x1xf32, #tpu.memory_space<vmem>>, vector<32x1xf32>
      tpu.vector_store %arg9[%c0_14, %c0_15], %20 {strides = array<i32>} : memref<32x1xf32, #tpu.memory_space<vmem>>, vector<32x1xf32>,
    } else {
    }
    %c0 = arith.constant 0 : index
    %c0_1 = arith.constant 0 : index
    %3 = vector.load %arg3[%c0, %c0_1] : memref<32x256xbf16, #tpu.memory_space<vmem>>, vector<32x256xbf16>
    %c0_2 = arith.constant 0 : index
    %c0_3 = arith.constant 0 : index
    %4 = vector.load %arg4[%c0_2, %c0_3] : memref<256x1xf32, #tpu.memory_space<vmem>>, vector<256x1xf32>
    %c0_4 = arith.constant 0 : index
    %c0_5 = arith.constant 0 : index
    %5 = vector.load %arg9[%c0_4, %c0_5] : memref<32x1xf32, #tpu.memory_space<vmem>>, vector<32x1xf32>
    %6 = arith.truncf %4 : vector<256x1xf32> to vector<256x1xbf16>
    %cst = arith.constant dense<0.000000e+00> : vector<32x1xf32>
    %7 = tpu.matmul %3, %6, %cst {dimension_numbers = #tpu.dot_dimension_numbers<[1], [0], [0], [1], [0, 0, 1, 1], [], []>} : vector<32x256xbf16>, vector<256x1xbf16>, vector<32x1xf32> -> vector<32x1xf32>
    %8 = arith.addf %5, %7 : vector<32x1xf32>
    %c0_6 = arith.constant 0 : index
    %c0_7 = arith.constant 0 : index
    %9 = vector.load %arg9[%c0_6, %c0_7] : memref<32x1xf32, #tpu.memory_space<vmem>>, vector<32x1xf32>
    tpu.vector_store %arg9[%c0_6, %c0_7], %8 {strides = array<i32>} : memref<32x1xf32, #tpu.memory_space<vmem>>, vector<32x1xf32>,
    %10 = arith.index_cast %arg1 : i32 to index
    %11 = memref.load %arg2[%10] : memref<2xi32, #tpu.memory_space<smem>>
    %c2_i32 = arith.constant 2 : i32
    %12 = arith.cmpi ne, %11, %c2_i32 : i32
    %13 = arith.extui %12 : i1 to i32
    %c0_i32_8 = arith.constant 0 : i32
    %14 = arith.cmpi ne, %13, %c0_i32_8 : i32
    scf.if %14 {
      %c0_10 = arith.constant 0 : index
      %c0_11 = arith.constant 0 : index
      %18 = vector.load %arg5[%c0_10, %c0_11] : memref<256x128xbf16, #tpu.memory_space<vmem>>, vector<256x128xbf16>
      %c0_12 = arith.constant 0 : index
      %c0_13 = arith.constant 0 : index
      %c0_14 = arith.constant 0 : index
      %19 = vector.load %arg6[%c0_12, %c0_13, %c0_14] : memref<1x128x128xbf16, #tpu.memory_space<vmem>>, vector<1x128x128xbf16>
      %20 = vector.shape_cast %19 : vector<1x128x128xbf16> to vector<128x128xbf16>
      %cst_15 = arith.constant dense<0.000000e+00> : vector<256x128xf32>
      %21 = tpu.matmul %18, %20, %cst_15 {dimension_numbers = #tpu.dot_dimension_numbers<[1], [0], [0], [1], [0, 0, 1, 1], [], []>} : vector<256x128xbf16>, vector<128x128xbf16>, vector<256x128xf32> -> vector<256x128xf32>
      %c0_16 = arith.constant 0 : index
      %c0_17 = arith.constant 0 : index
      %c0_18 = arith.constant 0 : index
      %22 = vector.load %arg7[%c0_16, %c0_17, %c0_18] : memref<1x1x128xf32, #tpu.memory_space<vmem>>, vector<1x1x128xf32>
      %23 = vector.shape_cast %22 : vector<1x1x128xf32> to vector<1x128xf32>
      %24 = vector.broadcast %23 : vector<1x128xf32> to vector<256x128xf32>
      %25 = arith.addf %21, %24 : vector<256x128xf32>
      %26 = vector.broadcast %4 : vector<256x1xf32> to vector<256x128xf32>
      %27 = arith.mulf %26, %25 : vector<256x128xf32>
      %28 = arith.truncf %27 : vector<256x128xf32> to vector<256x128xbf16>
      %c0_19 = arith.constant 0 : index
      %c0_20 = arith.constant 0 : index
      %29 = vector.load %arg8[%c0_19, %c0_20] : memref<32x128xf32, #tpu.memory_space<vmem>>, vector<32x128xf32>
      %cst_21 = arith.constant dense<0.000000e+00> : vector<32x128xf32>
      %30 = tpu.matmul %3, %28, %cst_21 {dimension_numbers = #tpu.dot_dimension_numbers<[1], [0], [0], [1], [0, 0, 1, 1], [], []>} : vector<32x256xbf16>, vector<256x128xbf16>, vector<32x128xf32> -> vector<32x128xf32>
      %31 = arith.addf %29, %30 : vector<32x128xf32>
      %c0_22 = arith.constant 0 : index
      %c0_23 = arith.constant 0 : index
      %32 = vector.load %arg8[%c0_22, %c0_23] : memref<32x128xf32, #tpu.memory_space<vmem>>, vector<32x128xf32>
      tpu.vector_store %arg8[%c0_22, %c0_23], %31 {strides = array<i32>} : memref<32x128xf32, #tpu.memory_space<vmem>>, vector<32x128xf32>,
    } else {
    }
    %c1_i32 = arith.constant 1 : i32
    %15 = arith.cmpi eq, %arg1, %c1_i32 : i32
    %16 = arith.extui %15 : i1 to i32
    %c0_i32_9 = arith.constant 0 : i32
    %17 = arith.cmpi ne, %16, %c0_i32_9 : i32
    scf.if %17 {
      %c0_10 = arith.constant 0 : index
      %c0_11 = arith.constant 0 : index
      %18 = vector.load %arg9[%c0_10, %c0_11] : memref<32x1xf32, #tpu.memory_space<vmem>>, vector<32x1xf32>
      %cst_12 = arith.constant 0.000000e+00 : f32
      %19 = vector.broadcast %cst_12 : f32 to vector<32x1xf32>
      %20 = arith.cmpf ogt, %18, %19 : vector<32x1xf32>
      %cst_13 = arith.constant 1.000000e+00 : f32
      %21 = vector.broadcast %cst_13 : f32 to vector<32x1xf32>
      %22 = arith.select %20, %18, %21 : vector<32x1xi1>, vector<32x1xf32>
      %23 = tpu.reciprocal %22 {approx = true} : vector<32x1xf32> -> vector<32x1xf32>
      %c0_14 = arith.constant 0 : index
      %c0_15 = arith.constant 0 : index
      %24 = vector.load %arg8[%c0_14, %c0_15] : memref<32x128xf32, #tpu.memory_space<vmem>>, vector<32x128xf32>
      %25 = vector.broadcast %23 : vector<32x1xf32> to vector<32x128xf32>
      %26 = arith.mulf %24, %25 : vector<32x128xf32>
      %c0_16 = arith.constant 0 : index
      %c0_17 = arith.constant 0 : index
      %27 = vector.load %arg8[%c0_16, %c0_17] : memref<32x128xf32, #tpu.memory_space<vmem>>, vector<32x128xf32>
      tpu.vector_store %arg8[%c0_16, %c0_17], %26 {strides = array<i32>} : memref<32x128xf32, #tpu.memory_space<vmem>>, vector<32x128xf32>,
    } else {
    }
    return
  }
  func.func @transform_0(%arg0: i32, %arg1: i32, %arg2: memref<2xi32, #tpu.memory_space<smem>>) -> (i32, i32) {
    %c0_i32 = arith.constant 0 : i32
    return %arg0, %arg1 : i32, i32
  }
  func.func @transform_1(%arg0: i32, %arg1: i32, %arg2: memref<2xi32, #tpu.memory_space<smem>>) -> (i32, i32) {
    %c0_i32 = arith.constant 0 : i32
    %c0_i32_0 = arith.constant 0 : i32
    return %arg1, %c0_i32 : i32, i32
  }
  func.func @transform_2(%arg0: i32, %arg1: i32, %arg2: memref<2xi32, #tpu.memory_space<smem>>) -> (i32, i32) {
    %c0_i32 = arith.constant 0 : i32
    %c0_i32_0 = arith.constant 0 : i32
    return %arg1, %c0_i32 : i32, i32
  }
  func.func @transform_3(%arg0: i32, %arg1: i32, %arg2: memref<2xi32, #tpu.memory_space<smem>>) -> (i32, i32, i32) {
    %0 = arith.index_cast %arg1 : i32 to index
    %1 = memref.load %arg2[%0] : memref<2xi32, #tpu.memory_space<smem>>
    %c0_i32 = arith.constant 0 : i32
    %c0_i32_0 = arith.constant 0 : i32
    %c0_i32_1 = arith.constant 0 : i32
    return %1, %c0_i32, %c0_i32_0 : i32, i32, i32
  }
  func.func @transform_4(%arg0: i32, %arg1: i32, %arg2: memref<2xi32, #tpu.memory_space<smem>>) -> (i32, i32, i32) {
    %0 = arith.index_cast %arg1 : i32 to index
    %1 = memref.load %arg2[%0] : memref<2xi32, #tpu.memory_space<smem>>
    %c0_i32 = arith.constant 0 : i32
    %c0_i32_0 = arith.constant 0 : i32
    %c0_i32_1 = arith.constant 0 : i32
    return %1, %c0_i32, %c0_i32_0 : i32, i32, i32
  }
  func.func @transform_5(%arg0: i32, %arg1: i32, %arg2: memref<2xi32, #tpu.memory_space<smem>>) -> (i32, i32) {
    %c0_i32 = arith.constant 0 : i32
    %c0_i32_0 = arith.constant 0 : i32
    return %arg0, %c0_i32 : i32, i32
  }
}

</mosaic_0001>

<llo_original>
// kernel: tpu_custom_call.1
$region0: #{tpu_custom_call.1}
  #allocation0 [shape = 'u32[]', space=smem, size = 0x4, offset = 0x4, fixed_abs, tag = 'smem constant byte address 0x4 - core index']
  #allocation1 [shape = 'u32[144,128]{1,0:T(1,128)}', space=vmem, size = 0x12000, scoped, tag = 'internal scratch']
  #allocation2 [shape = 'f32[32,1]{1,0:T(8,128)}', space=vmem, size = 0x4000, scoped, tag = 'scratch operand']
  #allocation3 [shape = 's32[1]{0}', space=sflag, size = 0x4, scoped, tag = 'scoped memory for tpu_custom_call.1']
  #allocation4 [shape = 'u8[512]{0}', space=smem, size = 0x200, scoped, tag = 'prefetched SMEM operand 0']
  %s0 = inlined_call_operand.vmem [shape: s32[2], index: 0, kind: input, shape index: {}]
  %s1 = inlined_call_operand.hbm [shape: bf16[64,512], index: 1, kind: input, shape index: {}]
  %s2 = inlined_call_operand.vmem [shape: f32[512,1], index: 2, kind: input, shape index: {}]
  %s3 = inlined_call_operand.vmem [shape: bf16[512,128], index: 3, kind: input, shape index: {}]
  %s4 = inlined_call_operand.vmem [shape: bf16[3,128,128], index: 4, kind: input, shape index: {}]
  %s5 = inlined_call_operand.vmem [shape: f32[3,1,128], index: 5, kind: input, shape index: {}]
  %s6 = inlined_call_operand.hbm [shape: f32[64,128], index: 6, kind: output, shape index: {}]
  %s7 = sld [smem:[#allocation0]]
  $region69: #{tpu_custom_call.1} parent=0
    _
  %s9 = ssub.s32 1, %s7
  %s10 = scalar_select 0, %s9, %s7
  %s11 = sshll.u32 %s0, 4
  %s12 = int_to_ptr.vmem [resolvable:$true] %s11
  %14 = dma.vmem_to_smem %s12, 16, [#allocation4], [#allocation3]
  %15 = dma.done [#allocation3], 16
  %16 = sfence
  $region1: #{tpu_custom_call.1} parent=0
    #allocation5 [shape = 'u8[32768]{0}', space=vmem, size = 0x8000, scoped, tag = 'input window, operand 1']
    #allocation6 [shape = 's32[2]{0}', space=sflag, size = 0x8, scoped, tag = 'scoped memory for tpu_custom_call.1']
    #allocation7 [shape = 's32[2]{0}', space=sflag, size = 0x8, scoped, tag = 'scoped memory for tpu_custom_call.1']
    #allocation8 [shape = 'u8[32768]{0}', space=vmem, size = 0x8000, scoped, tag = 'output window, operand 0']
    %17 = vsyncpa [#allocation6], 0
    %s18 = scalar_lea.sflag [#allocation6], 1
    %19 = vsyncpa %s18, 0
    %20 = vsyncpa [#allocation7], 0
    %s21 = scalar_lea.sflag [#allocation7], 1
    %22 = vsyncpa %s21, 0
    loop: start=0, step=1, limit=6
    $region2: #{tpu_custom_call.1} parent=1 // loop_pre_header
      _
    $region3: #{tpu_custom_call.1} parent=1 // loop_header
      %s24 = sphi 0, %s28
      %p25 = scmp.ge.s32.totalorder %s24, 6
      %s31 = sphi 0, %s43
      %s32 = sphi 0, %s39
      %s33 = sphi 0, %s31
      %s34 = sphi 0, %s32
      %s35 = sphi 0, %s33
      %s36 = sphi 0, %s34
      %s48 = sphi 0, %s50
      %s51 = sphi 0, %s48
      %s52 = sphi 0, %s51
      %s68 = sphi 0, %s52
      %s74 = sphi 0, %s76
      %s77 = sphi 0, %s74
      %s78 = sphi 0, %s77
      %s94 = sphi 0, %s78
      %s100 = sphi 0, %s102
      %s103 = sphi 0, %s100
      %s104 = sphi 0, %s103
      %s120 = sphi 0, %s104
      %s128 = sphi 0, %s130
      %s131 = sphi 0, %s128
      %s132 = sphi 0, %s131
      %s148 = sphi 0, %s132
      %s156 = sphi 0, %s158
      %s159 = sphi 0, %s156
      %s160 = sphi 0, %s159
      %s176 = sphi 0, %s160
      %s182 = sphi 0, %s184
      %s185 = sphi 0, %s182
      %s186 = sphi 0, %s185
      %s202 = sphi 0, %s186
    $region4: #{tpu_custom_call.1} parent=1 // loop_header_branch
      %27 = sbr.rel (%p25) target = $region8
    $region5: #{tpu_custom_call.1} parent=1 // loop_body
      %s29 = ssub.s32 %s24, 1
      %s30 = ssub.s32 %s24, 2
      %s37 = sadd.s32 1, %s32
      %p38 = scmp.ge.s32.totalorder %s37, 2
      %s39 = scalar_select %p38, 0, %s37
      %s40 = sadd.s32 1, %s31
      %s41 = scalar_select %p38, %s40, %s31
      %p42 = scmp.ge.s32.totalorder %s41, 2
      %s43 = scalar_select %p42, 0, %s41
      %s44 = ssub.s32 %s31, %s43
      %s45 = ssub.s32 %s32, %s39
      %s46 = sor.u32 %s44, %s45
      %p47 = scmp.eq.s32.totalorder %s46, 0
      %s49 = sadd.s32 %s48, 1
      %s50 = scalar_select %p47, %s48, %s49
      %p53 = pneg %p47
      %p54 = scmp.eq.s32.totalorder %s24, 3
      %p55 = por %p53, %p54
      %p56 = scmp.ne.s32.totalorder %s48, %s51
      %p57 = scmp.eq.s32.totalorder %s24, 0
      %p58 = por %p56, %p57
      %p59 = scmp.ne.s32.totalorder %s48, %s51
      %p60 = scmp.eq.s32.totalorder %s29, 3
      %p61 = por %p59, %p60
      %p62 = scmp.ne.s32.totalorder %s51, %s52
      %p63 = scmp.eq.s32.totalorder %s29, 0
      %p64 = por %p62, %p63
      %p65 = scmp.ne.s32.totalorder %s51, %s52
      %p66 = scmp.eq.s32.totalorder %s30, 3
      %p67 = por %p65, %p66
      %p69 = scmp.ne.s32.totalorder %s52, %s68
      %p70 = scmp.eq.s32.totalorder %s30, 0
      %p71 = por %p69, %p70
      %s72 = ssub.s32 %s32, %s39
      %p73 = scmp.eq.s32.totalorder %s72, 0
      %s75 = sadd.s32 %s74, 1
      %s76 = scalar_select %p73, %s74, %s75
      %p79 = pneg %p73
      %p80 = scmp.eq.s32.totalorder %s24, 3
      %p81 = por %p79, %p80
      %p82 = scmp.ne.s32.totalorder %s74, %s77
      %p83 = scmp.eq.s32.totalorder %s24, 0
      %p84 = por %p82, %p83
      %p85 = scmp.ne.s32.totalorder %s74, %s77
      %p86 = scmp.eq.s32.totalorder %s29, 3
      %p87 = por %p85, %p86
      %p88 = scmp.ne.s32.totalorder %s77, %s78
      %p89 = scmp.eq.s32.totalorder %s29, 0
      %p90 = por %p88, %p89
      %p91 = scmp.ne.s32.totalorder %s77, %s78
      %p92 = scmp.eq.s32.totalorder %s30, 3
      %p93 = por %p91, %p92
      %p95 = scmp.ne.s32.totalorder %s78, %s94
      %p96 = scmp.eq.s32.totalorder %s30, 0
      %p97 = por %p95, %p96
      %s98 = ssub.s32 %s32, %s39
      %p99 = scmp.eq.s32.totalorder %s98, 0
      %s101 = sadd.s32 %s100, 1
      %s102 = scalar_select %p99, %s100, %s101
      %p105 = pneg %p99
      %p106 = scmp.eq.s32.totalorder %s24, 3
      %p107 = por %p105, %p106
      %p108 = scmp.ne.s32.totalorder %s100, %s103
      %p109 = scmp.eq.s32.totalorder %s24, 0
      %p110 = por %p108, %p109
      %p111 = scmp.ne.s32.totalorder %s100, %s103
      %p112 = scmp.eq.s32.totalorder %s29, 3
      %p113 = por %p111, %p112
      %p114 = scmp.ne.s32.totalorder %s103, %s104
      %p115 = scmp.eq.s32.totalorder %s29, 0
      %p116 = por %p114, %p115
      %p117 = scmp.ne.s32.totalorder %s103, %s104
      %p118 = scmp.eq.s32.totalorder %s30, 3
      %p119 = por %p117, %p118
      %p121 = scmp.ne.s32.totalorder %s104, %s120
      %p122 = scmp.eq.s32.totalorder %s30, 0
      %p123 = por %p121, %p122
      %s124 = sld [smem:[#allocation4 + %s32]]
      %s125 = sld [smem:[#allocation4 + %s39]]
      %s126 = ssub.s32 %s124, %s125
      %p127 = scmp.eq.s32.totalorder %s126, 0
      %s129 = sadd.s32 %s128, 1
      %s130 = scalar_select %p127, %s128, %s129
      %p133 = pneg %p127
      %p134 = scmp.eq.s32.totalorder %s24, 3
      %p135 = por %p133, %p134
      %p136 = scmp.ne.s32.totalorder %s128, %s131
      %p137 = scmp.eq.s32.totalorder %s24, 0
      %p138 = por %p136, %p137
      %p139 = scmp.ne.s32.totalorder %s128, %s131
      %p140 = scmp.eq.s32.totalorder %s29, 3
      %p141 = por %p139, %p140
      %p142 = scmp.ne.s32.totalorder %s131, %s132
      %p143 = scmp.eq.s32.totalorder %s29, 0
      %p144 = por %p142, %p143
      %p145 = scmp.ne.s32.totalorder %s131, %s132
      %p146 = scmp.eq.s32.totalorder %s30, 3
      %p147 = por %p145, %p146
      %p149 = scmp.ne.s32.totalorder %s132, %s148
      %p150 = scmp.eq.s32.totalorder %s30, 0
      %p151 = por %p149, %p150
      %s152 = sld [smem:[#allocation4 + %s32]]
      %s153 = sld [smem:[#allocation4 + %s39]]
      %s154 = ssub.s32 %s152, %s153
      %p155 = scmp.eq.s32.totalorder %s154, 0
      %s157 = sadd.s32 %s156, 1
      %s158 = scalar_select %p155, %s156, %s157
      %p161 = pneg %p155
      %p162 = scmp.eq.s32.totalorder %s24, 3
      %p163 = por %p161, %p162
      %p164 = scmp.ne.s32.totalorder %s156, %s159
      %p165 = scmp.eq.s32.totalorder %s24, 0
      %p166 = por %p164, %p165
      %p167 = scmp.ne.s32.totalorder %s156, %s159
      %p168 = scmp.eq.s32.totalorder %s29, 3
      %p169 = por %p167, %p168
      %p170 = scmp.ne.s32.totalorder %s159, %s160
      %p171 = scmp.eq.s32.totalorder %s29, 0
      %p172 = por %p170, %p171
      %p173 = scmp.ne.s32.totalorder %s159, %s160
      %p174 = scmp.eq.s32.totalorder %s30, 3
      %p175 = por %p173, %p174
      %p177 = scmp.ne.s32.totalorder %s160, %s176
      %p178 = scmp.eq.s32.totalorder %s30, 0
      %p179 = por %p177, %p178
      %s180 = ssub.s32 %s31, %s43
      %p181 = scmp.eq.s32.totalorder %s180, 0
      %s183 = sadd.s32 %s182, 1
      %s184 = scalar_select %p181, %s182, %s183
      %p187 = pneg %p181
      %p188 = scmp.eq.s32.totalorder %s24, 3
      %p189 = por %p187, %p188
      %p190 = scmp.ne.s32.totalorder %s182, %s185
      %p191 = scmp.eq.s32.totalorder %s24, 0
      %p192 = por %p190, %p191
      %p193 = scmp.ne.s32.totalorder %s182, %s185
      %p194 = scmp.eq.s32.totalorder %s29, 3
      %p195 = por %p193, %p194
      %p196 = scmp.ne.s32.totalorder %s185, %s186
      %p197 = scmp.eq.s32.totalorder %s29, 0
      %p198 = por %p196, %p197
      %p199 = scmp.ne.s32.totalorder %s185, %s186
      %p200 = scmp.eq.s32.totalorder %s30, 3
      %p201 = por %p199, %p200
      %p203 = scmp.ne.s32.totalorder %s186, %s202
      %p204 = scmp.eq.s32.totalorder %s30, 0
      %p205 = por %p203, %p204
      %p206 = scmp.le.s32.totalorder 1, %s24
      %p207 = scmp.lt.s32.totalorder %s24, 5
      %p208 = pnand %p206, %p207
      %p209 = pneg %p208
      // Predicated region
      $region9: #{tpu_custom_call.1} parent=5 // pred_check
        _
      $region10: #{tpu_custom_call.1} parent=5 // pred_check_branch
        %211 = sbr.rel (%p208) target = $region12
      $region11: #{tpu_custom_call.1} parent=5 // pred_region
        %s212 = ssub.s32 %s24, 1
      $region12: #{tpu_custom_call.1} parent=5 // pred_fallthru
        _
      %p213 = scmp.lt.s32.totalorder %s24, 4
      // Predicated region
      $region13: #{tpu_custom_call.1} parent=5 // pred_check
        %p214 = pneg %p213
      $region14: #{tpu_custom_call.1} parent=5 // pred_check_branch
        %216 = sbr.rel (%p214) target = $region16
      $region15: #{tpu_custom_call.1} parent=5 // pred_region
        // Predicated region
        $region17: #{tpu_custom_call.1} parent=15 // pred_check
          %p217 = pneg %p58
        $region18: #{tpu_custom_call.1} parent=15 // pred_check_branch
          %219 = sbr.rel (%p217) target = $region20
        $region19: #{tpu_custom_call.1} parent=15 // pred_region
          %s220 = sand.u32 %s48, 1
          %s221 = scalar_lea.sflag [#allocation6], %s220
          %s222 = sand.u32 %s48, 1
          %s223 = smul.addr %s222, 32
          %s224 = scalar_lea.vmem [#allocation5], %s223
          %s225 = smul.u32 4, %s31
          %s226 = smul.u32 2, %s32
          %s228 = ssub.s32 512, 512
          %229 = vsyncadd %s221, %s228
          %s230 = smul.addr %s225, 4
          %s231 = sadd.s32 %s226, %s230
          %s232 = smul.addr %s231, 64
          %s233 = scalar_lea.hbm %s1, %s232
          %s234 = sshll.u32 %s224, 4
          %s235 = int_to_ptr.vmem [resolvable:$true] %s234
          %240 = dma.hbm_to_vmem [thread:$0]  %s233, 512, %s235, %s221, 256, 128, 8
        $region20: #{tpu_custom_call.1} parent=15 // pred_fallthru
          _
        // Predicated region
        $region21: #{tpu_custom_call.1} parent=15 // pred_check
          %p241 = pneg %p84
        $region22: #{tpu_custom_call.1} parent=15 // pred_check_branch
          %243 = sbr.rel (%p241) target = $region24
        $region23: #{tpu_custom_call.1} parent=15 // pred_region
          %s244 = smul.u32 32, %s32
          %p245 = scmp.lt.s32.totalorder %s244, 63
          %s246 = scalar_select %p245, %s244, 63
          %s247 = smul.addr %s246, 8
          %s248 = scalar_lea.vmem %s2, %s247
          %s249 = smul.u32 32, %s32
        $region24: #{tpu_custom_call.1} parent=15 // pred_fallthru
          _
        // Predicated region
        $region25: #{tpu_custom_call.1} parent=15 // pred_check
          %p250 = pneg %p110
        $region26: #{tpu_custom_call.1} parent=15 // pred_check_branch
          %252 = sbr.rel (%p250) target = $region28
        $region27: #{tpu_custom_call.1} parent=15 // pred_region
          %s253 = smul.u32 32, %s32
          %p254 = scmp.lt.s32.totalorder %s253, 63
          %s255 = scalar_select %p254, %s253, 63
          %s256 = smul.addr %s255, 4
          %s257 = scalar_lea.vmem %s3, %s256
          %s258 = smul.u32 32, %s32
        $region28: #{tpu_custom_call.1} parent=15 // pred_fallthru
          _
        // Predicated region
        $region29: #{tpu_custom_call.1} parent=15 // pred_check
          %p259 = pneg %p138
        $region30: #{tpu_custom_call.1} parent=15 // pred_check_branch
          %261 = sbr.rel (%p259) target = $region32
        $region31: #{tpu_custom_call.1} parent=15 // pred_region
          %s262 = sld [smem:[#allocation4 + %s32]]
          %p263 = scmp.lt.s32.totalorder %s262, 2
          %s264 = scalar_select %p263, %s262, 2
          %s265 = smul.addr %s264, 16
          %s266 = smul.addr %s265, 4
          %s267 = scalar_lea.vmem %s4, %s266
          %s268 = sld [smem:[#allocation4 + %s32]]
        $region32: #{tpu_custom_call.1} parent=15 // pred_fallthru
          _
        // Predicated region
        $region33: #{tpu_custom_call.1} parent=15 // pred_check
          %p269 = pneg %p166
        $region34: #{tpu_custom_call.1} parent=15 // pred_check_branch
          %271 = sbr.rel (%p269) target = $region36
        $region35: #{tpu_custom_call.1} parent=15 // pred_region
          %s272 = sld [smem:[#allocation4 + %s32]]
          %p273 = scmp.lt.s32.totalorder %s272, 2
          %s274 = scalar_select %p273, %s272, 2
          %s275 = scalar_lea.vmem %s5, %s274
          %s276 = sld [smem:[#allocation4 + %s32]]
        $region36: #{tpu_custom_call.1} parent=15 // pred_fallthru
          _
      $region16: #{tpu_custom_call.1} parent=5 // pred_fallthru
        _
      %p277 = scmp.le.s32.totalorder 1, %s24
      %p278 = scmp.lt.s32.totalorder %s24, 5
      %p279 = pnand %p277, %p278
      %p280 = pneg %p279
      // Predicated region
      $region37: #{tpu_custom_call.1} parent=5 // pred_check
        _
      $region38: #{tpu_custom_call.1} parent=5 // pred_check_branch
        %282 = sbr.rel (%p279) target = $region40
      $region39: #{tpu_custom_call.1} parent=5 // pred_region
        %s283 = ssub.s32 %s24, 1
        %s284 = sand.u32 %s51, 1
        %s285 = scalar_lea.sflag [#allocation6], %s284
        %s286 = sand.u32 %s51, 1
        %s287 = smul.addr %s286, 32
        %s288 = scalar_lea.vmem [#allocation5], %s287
        // Predicated region
        $region41: #{tpu_custom_call.1} parent=39 // pred_check
          %p289 = pneg %p64
        $region42: #{tpu_custom_call.1} parent=39 // pred_check_branch
          %291 = sbr.rel (%p289) target = $region44
        $region43: #{tpu_custom_call.1} parent=39 // pred_region
          %292 = dma.done %s285, 512
        $region44: #{tpu_custom_call.1} parent=39 // pred_fallthru
          _
        %s293 = sand.u32 %s51, 1
        %s294 = scalar_lea.sflag [#allocation6], %s293
        %s295 = sand.u32 %s51, 1
        %s296 = smul.addr %s295, 32
        %s297 = scalar_lea.vmem [#allocation5], %s296
        %p298 = pneg %p64
        %p299 = pneg %p61
        %s300 = smul.u32 32, %s34
        %p301 = scmp.lt.s32.totalorder %s300, 63
        %s302 = scalar_select %p301, %s300, 63
        %s303 = smul.addr %s302, 8
        %s304 = scalar_lea.vmem %s2, %s303
        %p305 = pneg %p90
        %p306 = pneg %p87
        %s307 = smul.u32 32, %s34
        %p308 = scmp.lt.s32.totalorder %s307, 63
        %s309 = scalar_select %p308, %s307, 63
        %s310 = smul.addr %s309, 4
        %s311 = scalar_lea.vmem %s3, %s310
        %p312 = pneg %p116
        %p313 = pneg %p113
        %s314 = sld [smem:[#allocation4 + %s34]]
        %p315 = scmp.lt.s32.totalorder %s314, 2
        %s316 = scalar_select %p315, %s314, 2
        %s317 = smul.addr %s316, 16
        %s318 = smul.addr %s317, 4
        %s319 = scalar_lea.vmem %s4, %s318
        %p320 = pneg %p144
        %p321 = pneg %p141
        %s322 = sld [smem:[#allocation4 + %s34]]
        %p323 = scmp.lt.s32.totalorder %s322, 2
        %s324 = scalar_select %p323, %s322, 2
        %s325 = scalar_lea.vmem %s5, %s324
        %p326 = pneg %p172
        %p327 = pneg %p169
        %p328 = pneg %p198
        %p329 = pneg %p195
        %s330 = sand.u32 %s185, 1
        %s331 = scalar_lea.sflag [#allocation7], %s330
        %s332 = sand.u32 %s185, 1
        %s333 = smul.addr %s332, 32
        %s334 = scalar_lea.vmem [#allocation8], %s333
        %s335 = smul.u32 4, %s33
        %s336 = smul.u32 2, %s34
        %s337 = smul.u32 32, %s34
        %p338 = scmp.lt.s32.totalorder %s337, 63
        %s339 = scalar_select %p338, %s337, 63
        %s340 = smul.addr %s339, 8
        %s341 = scalar_lea.vmem %s2, %s340
        %s342 = smul.u32 32, %s34
        %s343 = smul.u32 32, %s34
        %p344 = scmp.lt.s32.totalorder %s343, 63
        %s345 = scalar_select %p344, %s343, 63
        %s346 = smul.addr %s345, 4
        %s347 = scalar_lea.vmem %s3, %s346
        %s348 = smul.u32 32, %s34
        %s349 = sld [smem:[#allocation4 + %s34]]
        %p350 = scmp.lt.s32.totalorder %s349, 2
        %s351 = scalar_select %p350, %s349, 2
        %s352 = smul.addr %s351, 16
        %s353 = smul.addr %s352, 4
        %s354 = scalar_lea.vmem %s4, %s353
        %s355 = sld [smem:[#allocation4 + %s34]]
        %s356 = sld [smem:[#allocation4 + %s34]]
        %p357 = scmp.lt.s32.totalorder %s356, 2
        %s358 = scalar_select %p357, %s356, 2
        %s359 = scalar_lea.vmem %s5, %s358
        %s360 = sld [smem:[#allocation4 + %s34]]
        %s361 = smul.u32 4, %s33
        %p363 = scmp.eq.s32.totalorder %s34, 0
        // Predicated region
        $region45: #{tpu_custom_call.1} parent=39 // pred_check
          %p364 = pneg %p363
        $region46: #{tpu_custom_call.1} parent=39 // pred_check_branch
          %366 = sbr.rel (%p364) target = $region48
        $region47: #{tpu_custom_call.1} parent=39 // pred_region
          %367 = vst [vmem:[%s334] sm:$0xff] 0.0
          %368 = vst [vmem:[%s334 + $0x8] sm:$0xff] 0.0
          %369 = vst [vmem:[%s334 + $0x10] sm:$0xff] 0.0
          %370 = vst [vmem:[%s334 + $0x18] sm:$0xff] 0.0
          %vm371 = vcmask 7168
          %372 = vst.msk [vmem:[#allocation2] sm:$0xff] %vm371, 0.0
          %373 = vst.msk [vmem:[#allocation2 + $0x8] sm:$0xff] %vm371, 0.0
          %374 = vst.msk [vmem:[#allocation2 + $0x10] sm:$0xff] %vm371, 0.0
          %375 = vst.msk [vmem:[#allocation2 + $0x18] sm:$0xff] %vm371, 0.0
        $region48: #{tpu_custom_call.1} parent=39 // pred_fallthru
          _
        %v376 = vld [vmem:[%s288] sm:$0xff]
        %v377 = vld [vmem:[%s288 + $0x8] sm:$0xff]
        %v378 = vld [vmem:[%s288 + $0x10] sm:$0xff]
        %v379 = vld [vmem:[%s288 + $0x18] sm:$0xff]
        %v380 = vld [vmem:[%s341] sm:$0xff]
        %v381 = vld [vmem:[%s341 + $0x8] sm:$0xff]
        %v382 = vld [vmem:[%s341 + $0x10] sm:$0xff]
        %v383 = vld [vmem:[%s341 + $0x18] sm:$0xff]
        %v384 = vld [vmem:[%s341 + $0x20] sm:$0xff]
        %v385 = vld [vmem:[%s341 + $0x28] sm:$0xff]
        %v386 = vld [vmem:[%s341 + $0x30] sm:$0xff]
        %v387 = vld [vmem:[%s341 + $0x38] sm:$0xff]
        %v388 = vld [vmem:[%s341 + $0x40] sm:$0xff]
        %v389 = vld [vmem:[%s341 + $0x48] sm:$0xff]
        %v390 = vld [vmem:[%s341 + $0x50] sm:$0xff]
        %v391 = vld [vmem:[%s341 + $0x58] sm:$0xff]
        %v392 = vld [vmem:[%s341 + $0x60] sm:$0xff]
        %v393 = vld [vmem:[%s341 + $0x68] sm:$0xff]
        %v394 = vld [vmem:[%s341 + $0x70] sm:$0xff]
        %v395 = vld [vmem:[%s341 + $0x78] sm:$0xff]
        %v396 = vld [vmem:[%s341 + $0x80] sm:$0xff]
        %v397 = vld [vmem:[%s341 + $0x88] sm:$0xff]
        %v398 = vld [vmem:[%s341 + $0x90] sm:$0xff]
        %v399 = vld [vmem:[%s341 + $0x98] sm:$0xff]
        %v400 = vld [vmem:[%s341 + $0xa0] sm:$0xff]
        %v401 = vld [vmem:[%s341 + $0xa8] sm:$0xff]
        %v402 = vld [vmem:[%s341 + $0xb0] sm:$0xff]
        %v403 = vld [vmem:[%s341 + $0xb8] sm:$0xff]
        %v404 = vld [vmem:[%s341 + $0xc0] sm:$0xff]
        %v405 = vld [vmem:[%s341 + $0xc8] sm:$0xff]
        %v406 = vld [vmem:[%s341 + $0xd0] sm:$0xff]
        %v407 = vld [vmem:[%s341 + $0xd8] sm:$0xff]
        %v408 = vld [vmem:[%s341 + $0xe0] sm:$0xff]
        %v409 = vld [vmem:[%s341 + $0xe8] sm:$0xff]
        %v410 = vld [vmem:[%s341 + $0xf0] sm:$0xff]
        %v411 = vld [vmem:[%s341 + $0xf8] sm:$0xff]
        %v412 = vld [vmem:[#allocation2] sm:$0xff]
        %v413 = vld [vmem:[#allocation2 + $0x8] sm:$0xff]
        %v414 = vld [vmem:[#allocation2 + $0x10] sm:$0xff]
        %v415 = vld [vmem:[#allocation2 + $0x18] sm:$0xff]
        %v416 = vpack.c.bf16 %v381, %v380
        %v417 = vpack.c.bf16 %v383, %v382
        %v418 = vpack.c.bf16 %v385, %v384
        %v419 = vpack.c.bf16 %v387, %v386
        %v420 = vpack.c.bf16 %v389, %v388
        %v421 = vpack.c.bf16 %v391, %v390
        %v422 = vpack.c.bf16 %v393, %v392
        %v423 = vpack.c.bf16 %v395, %v394
        %v424 = vpack.c.bf16 %v397, %v396
        %v425 = vpack.c.bf16 %v399, %v398
        %v426 = vpack.c.bf16 %v401, %v400
        %v427 = vpack.c.bf16 %v403, %v402
        %v428 = vpack.c.bf16 %v405, %v404
        %v429 = vpack.c.bf16 %v407, %v406
        %v430 = vpack.c.bf16 %v409, %v408
        %v431 = vpack.c.bf16 %v411, %v410
        %v436 = vunpack.c.l.b16 %v376
        %v437 = vunpack.c.h.b16 %v376
        %v438 = vunpack.c.l.b16 %v377
        %v439 = vunpack.c.h.b16 %v377
        %v440 = vunpack.c.l.b16 %v378
        %v441 = vunpack.c.h.b16 %v378
        %v442 = vunpack.c.l.b16 %v379
        %v443 = vunpack.c.h.b16 %v379
        %v444 = vpack.c.b16 %v438, %v436
        %v445 = vpack.c.b16 %v439, %v437
        %v446 = vpack.c.b16 %v442, %v440
        %v447 = vpack.c.b16 %v443, %v441
        %452 = vmatprep.subr.bf16.mxu0 0
        %453 = vmatpush1.bf16.msra.mxu0 %v416
        %454 = vmatprep.subr.bf16.mxu0 0
        %455 = vmatpush1.bf16.msra.mxu0 %v417
        %456 = vmatprep.subr.bf16.mxu0 0
        %457 = vmatpush1.bf16.msra.mxu0 %v418
        %458 = vmatprep.subr.bf16.mxu0 0
        %459 = vmatpush1.bf16.msra.mxu0 %v419
        %460 = vmatprep.subr.bf16.mxu0 0
        %461 = vmatpush1.bf16.msra.mxu0 %v420
        %462 = vmatprep.subr.bf16.mxu0 0
        %463 = vmatpush1.bf16.msra.mxu0 %v421
        %464 = vmatprep.subr.bf16.mxu0 0
        %465 = vmatpush1.bf16.msra.mxu0 %v422
        %466 = vmatprep.subr.bf16.mxu0 0
        %467 = vmatpush1.bf16.msra.mxu0 %v423
        %468 = vmatprep.subr.bf16.mxu0 0
        %469 = vmatpush1.bf16.msra.mxu0 %v424
        %470 = vmatprep.subr.bf16.mxu0 0
        %471 = vmatpush1.bf16.msra.mxu0 %v425
        %472 = vmatprep.subr.bf16.mxu0 0
        %473 = vmatpush1.bf16.msra.mxu0 %v426
        %474 = vmatprep.subr.bf16.mxu0 0
        %475 = vmatpush1.bf16.msra.mxu0 %v427
        %476 = vmatprep.subr.bf16.mxu0 0
        %477 = vmatpush1.bf16.msra.mxu0 %v428
        %478 = vmatprep.subr.bf16.mxu0 0
        %479 = vmatpush1.bf16.msra.mxu0 %v429
        %480 = vmatprep.subr.bf16.mxu0 0
        %481 = vmatpush1.bf16.msra.mxu0 %v430
        %482 = vmatprep.subr.bf16.mxu0 0
        %483 = vmatpush1.bf16.msra.mxu0 %v431
        %484 = vmatprep.mubr.bf16.mxu0 %v445
        %485 = vmatmul.mubr.bf16.gmra.mrb[0].mxu0 %v444
        %v486 = vpop.f32.mrb[0].mxu0
        %v487 = vadd.f32 0.0, %v486
        %v488 = vpop.f32.mrb[0].mxu0
        %v489 = vpop.f32.mrb[0].mxu0
        %v490 = vadd.f32 0.0, %v489
        %v491 = vpop.f32.mrb[0].mxu0
        %492 = vmatprep.mubr.bf16.mxu0 %v447
        %493 = vmatmul.mubr.bf16.gmra.mrb[0].mxu0 %v446
        %v494 = vpop.f32.mrb[0].mxu0
        %v495 = vadd.f32 0.0, %v494
        %v496 = vpop.f32.mrb[0].mxu0
        %v497 = vpop.f32.mrb[0].mxu0
        %v498 = vadd.f32 0.0, %v497
        %v499 = vpop.f32.mrb[0].mxu0
        %500 = vdwg.mxu0
        %v501 = vadd.f32 %v412, %v487
        %v502 = vadd.f32 %v413, %v490
        %v503 = vadd.f32 %v414, %v495
        %v504 = vadd.f32 %v415, %v498
        %vm505 = vcmask 7168
        %506 = vst.msk [vmem:[#allocation2] sm:$0xff] %vm505, %v501
        %507 = vst.msk [vmem:[#allocation2 + $0x8] sm:$0xff] %vm505, %v502
        %508 = vst.msk [vmem:[#allocation2 + $0x10] sm:$0xff] %vm505, %v503
        %509 = vst.msk [vmem:[#allocation2 + $0x18] sm:$0xff] %vm505, %v504
        %s510 = sld [smem:[#allocation4 + %s34]]
        %p511 = scmp.ne.s32.totalorder %s510, 2
        // Predicated region
        $region49: #{tpu_custom_call.1} parent=39 // pred_check
          %p512 = pneg %p511
        $region50: #{tpu_custom_call.1} parent=39 // pred_check_branch
          %514 = sbr.rel (%p512) target = $region52
        $region51: #{tpu_custom_call.1} parent=39 // pred_region
          %v515 = vld [vmem:[%s347] sm:$0xf]
          %v516 = vld [vmem:[%s347 + $0x4] sm:$0xf]
          %v517 = vld [vmem:[%s347 + $0x8] sm:$0xf]
          %v518 = vld [vmem:[%s347 + $0xc] sm:$0xf]
          %v519 = vld [vmem:[%s347 + $0x10] sm:$0xf]
          %v520 = vld [vmem:[%s347 + $0x14] sm:$0xf]
          %v521 = vld [vmem:[%s347 + $0x18] sm:$0xf]
          %v522 = vld [vmem:[%s347 + $0x1c] sm:$0xf]
          %v523 = vld [vmem:[%s347 + $0x20] sm:$0xf]
          %v524 = vld [vmem:[%s347 + $0x24] sm:$0xf]
          %v525 = vld [vmem:[%s347 + $0x28] sm:$0xf]
          %v526 = vld [vmem:[%s347 + $0x2c] sm:$0xf]
          %v527 = vld [vmem:[%s347 + $0x30] sm:$0xf]
          %v528 = vld [vmem:[%s347 + $0x34] sm:$0xf]
          %v529 = vld [vmem:[%s347 + $0x38] sm:$0xf]
          %v530 = vld [vmem:[%s347 + $0x3c] sm:$0xf]
          %v531 = vld [vmem:[%s347 + $0x40] sm:$0xf]
          %v532 = vld [vmem:[%s347 + $0x44] sm:$0xf]
          %v533 = vld [vmem:[%s347 + $0x48] sm:$0xf]
          %v534 = vld [vmem:[%s347 + $0x4c] sm:$0xf]
          %v535 = vld [vmem:[%s347 + $0x50] sm:$0xf]
          %v536 = vld [vmem:[%s347 + $0x54] sm:$0xf]
          %v537 = vld [vmem:[%s347 + $0x58] sm:$0xf]
          %v538 = vld [vmem:[%s347 + $0x5c] sm:$0xf]
          %v539 = vld [vmem:[%s347 + $0x60] sm:$0xf]
          %v540 = vld [vmem:[%s347 + $0x64] sm:$0xf]
          %v541 = vld [vmem:[%s347 + $0x68] sm:$0xf]
          %v542 = vld [vmem:[%s347 + $0x6c] sm:$0xf]
          %v543 = vld [vmem:[%s347 + $0x70] sm:$0xf]
          %v544 = vld [vmem:[%s347 + $0x74] sm:$0xf]
          %v545 = vld [vmem:[%s347 + $0x78] sm:$0xf]
          %v546 = vld [vmem:[%s347 + $0x7c] sm:$0xf]
          %v547 = vld [vmem:[%s354] sm:$0xf]
          %v548 = vld [vmem:[%s354 + $0x4] sm:$0xf]
          %v549 = vld [vmem:[%s354 + $0x8] sm:$0xf]
          %v550 = vld [vmem:[%s354 + $0xc] sm:$0xf]
          %v551 = vld [vmem:[%s354 + $0x10] sm:$0xf]
          %v552 = vld [vmem:[%s354 + $0x14] sm:$0xf]
          %v553 = vld [vmem:[%s354 + $0x18] sm:$0xf]
          %v554 = vld [vmem:[%s354 + $0x1c] sm:$0xf]
          %v555 = vld [vmem:[%s354 + $0x20] sm:$0xf]
          %v556 = vld [vmem:[%s354 + $0x24] sm:$0xf]
          %v557 = vld [vmem:[%s354 + $0x28] sm:$0xf]
          %v558 = vld [vmem:[%s354 + $0x2c] sm:$0xf]
          %v559 = vld [vmem:[%s354 + $0x30] sm:$0xf]
          %v560 = vld [vmem:[%s354 + $0x34] sm:$0xf]
          %v561 = vld [vmem:[%s354 + $0x38] sm:$0xf]
          %v562 = vld [vmem:[%s354 + $0x3c] sm:$0xf]
          %v563 = vld [vmem:[%s359] sm:$0x1]
          %v565 = vlaneseq
          %v566 = vshrl.u32 %v565, 7
          %v567 = vsub.s32 0, %v566
          %v568 = vrot.slane %v563, %v567
          %v602 = vunpack.c.l.b16 %v515
          %v603 = vunpack.c.l.b16 %v516
          %v604 = vunpack.c.l.b16 %v517
          %v605 = vunpack.c.l.b16 %v518
          %v606 = vunpack.c.l.b16 %v519
          %v607 = vunpack.c.l.b16 %v520
          %v608 = vunpack.c.l.b16 %v521
          %v609 = vunpack.c.l.b16 %v522
          %v610 = vunpack.c.l.b16 %v523
          %v611 = vunpack.c.l.b16 %v524
          %v612 = vunpack.c.l.b16 %v525
          %v613 = vunpack.c.l.b16 %v526
          %v614 = vunpack.c.l.b16 %v527
          %v615 = vunpack.c.l.b16 %v528
          %v616 = vunpack.c.l.b16 %v529
          %v617 = vunpack.c.l.b16 %v530
          %v618 = vunpack.c.l.b16 %v531
          %v619 = vunpack.c.l.b16 %v532
          %v620 = vunpack.c.l.b16 %v533
          %v621 = vunpack.c.l.b16 %v534
          %v622 = vunpack.c.l.b16 %v535
          %v623 = vunpack.c.l.b16 %v536
          %v624 = vunpack.c.l.b16 %v537
          %v625 = vunpack.c.l.b16 %v538
          %v626 = vunpack.c.l.b16 %v539
          %v627 = vunpack.c.l.b16 %v540
          %v628 = vunpack.c.l.b16 %v541
          %v629 = vunpack.c.l.b16 %v542
          %v630 = vunpack.c.l.b16 %v543
          %v631 = vunpack.c.l.b16 %v544
          %v632 = vunpack.c.l.b16 %v545
          %v633 = vunpack.c.l.b16 %v546
          %v634 = vpack.c.b16 %v603, %v602
          %v635 = vpack.c.b16 %v605, %v604
          %v636 = vpack.c.b16 %v607, %v606
          %v637 = vpack.c.b16 %v609, %v608
          %v638 = vpack.c.b16 %v611, %v610
          %v639 = vpack.c.b16 %v613, %v612
          %v640 = vpack.c.b16 %v615, %v614
          %v641 = vpack.c.b16 %v617, %v616
          %v642 = vpack.c.b16 %v619, %v618
          %v643 = vpack.c.b16 %v621, %v620
          %v644 = vpack.c.b16 %v623, %v622
          %v645 = vpack.c.b16 %v625, %v624
          %v646 = vpack.c.b16 %v627, %v626
          %v647 = vpack.c.b16 %v629, %v628
          %v648 = vpack.c.b16 %v631, %v630
          %v649 = vpack.c.b16 %v633, %v632
          %v682 = vunpack.c.l.b16 %v547
          %v683 = vunpack.c.l.b16 %v548
          %v684 = vunpack.c.l.b16 %v549
          %v685 = vunpack.c.l.b16 %v550
          %v686 = vunpack.c.l.b16 %v551
          %v687 = vunpack.c.l.b16 %v552
          %v688 = vunpack.c.l.b16 %v553
          %v689 = vunpack.c.l.b16 %v554
          %v690 = vunpack.c.l.b16 %v555
          %v691 = vunpack.c.l.b16 %v556
          %v692 = vunpack.c.l.b16 %v557
          %v693 = vunpack.c.l.b16 %v558
          %v694 = vunpack.c.l.b16 %v559
          %v695 = vunpack.c.l.b16 %v560
          %v696 = vunpack.c.l.b16 %v561
          %v697 = vunpack.c.l.b16 %v562
          %v698 = vpack.c.b16 %v683, %v682
          %v699 = vpack.c.b16 %v685, %v684
          %v700 = vpack.c.b16 %v687, %v686
          %v701 = vpack.c.b16 %v689, %v688
          %v702 = vpack.c.b16 %v691, %v690
          %v703 = vpack.c.b16 %v693, %v692
          %v704 = vpack.c.b16 %v695, %v694
          %v705 = vpack.c.b16 %v697, %v696
          %714 = vmatprep.subr.bf16.mxu0 0
          %715 = vmatpush1.bf16.msra.mxu0 %v698
          %716 = vmatprep.subr.bf16.mxu0 0
          %717 = vmatpush1.bf16.msra.mxu0 %v699
          %718 = vmatprep.subr.bf16.mxu0 0
          %719 = vmatpush1.bf16.msra.mxu0 %v700
          %720 = vmatprep.subr.bf16.mxu0 0
          %721 = vmatpush1.bf16.msra.mxu0 %v701
          %722 = vmatprep.subr.bf16.mxu0 0
          %723 = vmatpush1.bf16.msra.mxu0 %v702
          %724 = vmatprep.subr.bf16.mxu0 0
          %725 = vmatpush1.bf16.msra.mxu0 %v703
          %726 = vmatprep.subr.bf16.mxu0 0
          %727 = vmatpush1.bf16.msra.mxu0 %v704
          %728 = vmatprep.subr.bf16.mxu0 0
          %729 = vmatpush1.bf16.msra.mxu0 %v705
          %730 = vmatprep.subr.bf16.mxu0 0
          %731 = vmatpush1.bf16.msra.mxu0 0
          %732 = vmatprep.subr.bf16.mxu0 0
          %733 = vmatpush1.bf16.msra.mxu0 0
          %734 = vmatprep.subr.bf16.mxu0 0
          %735 = vmatpush1.bf16.msra.mxu0 0
          %736 = vmatprep.subr.bf16.mxu0 0
          %737 = vmatpush1.bf16.msra.mxu0 0
          %738 = vmatprep.subr.bf16.mxu0 0
          %739 = vmatpush1.bf16.msra.mxu0 0
          %740 = vmatprep.subr.bf16.mxu0 0
          %741 = vmatpush1.bf16.msra.mxu0 0
          %742 = vmatprep.subr.bf16.mxu0 0
          %743 = vmatpush1.bf16.msra.mxu0 0
          %744 = vmatprep.subr.bf16.mxu0 0
          %745 = vmatpush1.bf16.msra.mxu0 0
          %746 = vmatprep.mubr.bf16.mxu0 0
          %747 = vmatmul.mubr.bf16.gmra.mrb[0].mxu0 %v634
          %v748 = vpop.f32.mrb[0].mxu0
          %v749 = vadd.f32 %v568, %v748
          %v750 = vpop.f32.mrb[0].mxu0
          %v751 = vpop.f32.mrb[0].mxu0
          %v752 = vadd.f32 %v568, %v751
          %v753 = vpop.f32.mrb[0].mxu0
          %754 = vmatprep.mubr.bf16.mxu0 0
          %755 = vmatmul.mubr.bf16.gmra.mrb[0].mxu0 %v635
          %v756 = vpop.f32.mrb[0].mxu0
          %v757 = vadd.f32 %v568, %v756
          %v758 = vpop.f32.mrb[0].mxu0
          %v759 = vpop.f32.mrb[0].mxu0
          %v760 = vadd.f32 %v568, %v759
          %v761 = vpop.f32.mrb[0].mxu0
          %762 = vmatprep.mubr.bf16.mxu0 0
          %763 = vmatmul.mubr.bf16.gmra.mrb[0].mxu0 %v636
          %v764 = vpop.f32.mrb[0].mxu0
          %v765 = vadd.f32 %v568, %v764
          %v766 = vpop.f32.mrb[0].mxu0
          %v767 = vpop.f32.mrb[0].mxu0
          %v768 = vadd.f32 %v568, %v767
          %v769 = vpop.f32.mrb[0].mxu0
          %770 = vmatprep.mubr.bf16.mxu0 0
          %771 = vmatmul.mubr.bf16.gmra.mrb[0].mxu0 %v637
          %v772 = vpop.f32.mrb[0].mxu0
          %v773 = vadd.f32 %v568, %v772
          %v774 = vpop.f32.mrb[0].mxu0
          %v775 = vpop.f32.mrb[0].mxu0
          %v776 = vadd.f32 %v568, %v775
          %v777 = vpop.f32.mrb[0].mxu0
          %778 = vmatprep.mubr.bf16.mxu0 0
          %779 = vmatmul.mubr.bf16.gmra.mrb[0].mxu0 %v638
          %v780 = vpop.f32.mrb[0].mxu0
          %v781 = vadd.f32 %v568, %v780
          %v782 = vpop.f32.mrb[0].mxu0
          %v783 = vpop.f32.mrb[0].mxu0
          %v784 = vadd.f32 %v568, %v783
          %v785 = vpop.f32.mrb[0].mxu0
          %786 = vmatprep.mubr.bf16.mxu0 0
          %787 = vmatmul.mubr.bf16.gmra.mrb[0].mxu0 %v639
          %v788 = vpop.f32.mrb[0].mxu0
          %v789 = vadd.f32 %v568, %v788
          %v790 = vpop.f32.mrb[0].mxu0
          %v791 = vpop.f32.mrb[0].mxu0
          %v792 = vadd.f32 %v568, %v791
          %v793 = vpop.f32.mrb[0].mxu0
          %794 = vmatprep.mubr.bf16.mxu0 0
          %795 = vmatmul.mubr.bf16.gmra.mrb[0].mxu0 %v640
          %v796 = vpop.f32.mrb[0].mxu0
          %v797 = vadd.f32 %v568, %v796
          %v798 = vpop.f32.mrb[0].mxu0
          %v799 = vpop.f32.mrb[0].mxu0
          %v800 = vadd.f32 %v568, %v799
          %v801 = vpop.f32.mrb[0].mxu0
          %802 = vmatprep.mubr.bf16.mxu0 0
          %803 = vmatmul.mubr.bf16.gmra.mrb[0].mxu0 %v641
          %v804 = vpop.f32.mrb[0].mxu0
          %v805 = vadd.f32 %v568, %v804
          %v806 = vpop.f32.mrb[0].mxu0
          %v807 = vpop.f32.mrb[0].mxu0
          %v808 = vadd.f32 %v568, %v807
          %v809 = vpop.f32.mrb[0].mxu0
          %810 = vmatprep.mubr.bf16.mxu0 0
          %811 = vmatmul.mubr.bf16.gmra.mrb[0].mxu0 %v642
          %v812 = vpop.f32.mrb[0].mxu0
          %v813 = vadd.f32 %v568, %v812
          %v814 = vpop.f32.mrb[0].mxu0
          %v815 = vpop.f32.mrb[0].mxu0
          %v816 = vadd.f32 %v568, %v815
          %v817 = vpop.f32.mrb[0].mxu0
          %818 = vmatprep.mubr.bf16.mxu0 0
          %819 = vmatmul.mubr.bf16.gmra.mrb[0].mxu0 %v643
          %v820 = vpop.f32.mrb[0].mxu0
          %v821 = vadd.f32 %v568, %v820
          %v822 = vpop.f32.mrb[0].mxu0
          %v823 = vpop.f32.mrb[0].mxu0
          %v824 = vadd.f32 %v568, %v823
          %v825 = vpop.f32.mrb[0].mxu0
          %826 = vmatprep.mubr.bf16.mxu0 0
          %827 = vmatmul.mubr.bf16.gmra.mrb[0].mxu0 %v644
          %v828 = vpop.f32.mrb[0].mxu0
          %v829 = vadd.f32 %v568, %v828
          %v830 = vpop.f32.mrb[0].mxu0
          %v831 = vpop.f32.mrb[0].mxu0
          %v832 = vadd.f32 %v568, %v831
          %v833 = vpop.f32.mrb[0].mxu0
          %834 = vmatprep.mubr.bf16.mxu0 0
          %835 = vmatmul.mubr.bf16.gmra.mrb[0].mxu0 %v645
          %v836 = vpop.f32.mrb[0].mxu0
          %v837 = vadd.f32 %v568, %v836
          %v838 = vpop.f32.mrb[0].mxu0
          %v839 = vpop.f32.mrb[0].mxu0
          %v840 = vadd.f32 %v568, %v839
          %v841 = vpop.f32.mrb[0].mxu0
          %842 = vmatprep.mubr.bf16.mxu0 0
          %843 = vmatmul.mubr.bf16.gmra.mrb[0].mxu0 %v646
          %v844 = vpop.f32.mrb[0].mxu0
          %v845 = vadd.f32 %v568, %v844
          %v846 = vpop.f32.mrb[0].mxu0
          %v847 = vpop.f32.mrb[0].mxu0
          %v848 = vadd.f32 %v568, %v847
          %v849 = vpop.f32.mrb[0].mxu0
          %850 = vmatprep.mubr.bf16.mxu0 0
          %851 = vmatmul.mubr.bf16.gmra.mrb[0].mxu0 %v647
          %v852 = vpop.f32.mrb[0].mxu0
          %v853 = vadd.f32 %v568, %v852
          %v854 = vpop.f32.mrb[0].mxu0
          %v855 = vpop.f32.mrb[0].mxu0
          %v856 = vadd.f32 %v568, %v855
          %v857 = vpop.f32.mrb[0].mxu0
          %858 = vmatprep.mubr.bf16.mxu0 0
          %859 = vmatmul.mubr.bf16.gmra.mrb[0].mxu0 %v648
          %v860 = vpop.f32.mrb[0].mxu0
          %v861 = vadd.f32 %v568, %v860
          %v862 = vpop.f32.mrb[0].mxu0
          %v863 = vpop.f32.mrb[0].mxu0
          %v864 = vadd.f32 %v568, %v863
          %v865 = vpop.f32.mrb[0].mxu0
          %866 = vmatprep.mubr.bf16.mxu0 0
          %867 = vmatmul.mubr.bf16.gmra.mrb[0].mxu0 %v649
          %v868 = vpop.f32.mrb[0].mxu0
          %v869 = vadd.f32 %v568, %v868
          %v870 = vpop.f32.mrb[0].mxu0
          %v871 = vpop.f32.mrb[0].mxu0
          %v872 = vadd.f32 %v568, %v871
          %v873 = vpop.f32.mrb[0].mxu0
          %874 = vdwg.mxu0
          %876 = vset.pattern.permute.xlu0 0
          %877 = vperm.xlu0 %876, %v380
          %v878 = vpop.permute.xlu0 %877
          %881 = vset.pattern.permute.xlu0 0
          %882 = vperm.xlu0 %881, %v381
          %v883 = vpop.permute.xlu0 %882
          %886 = vset.pattern.permute.xlu0 0
          %887 = vperm.xlu0 %886, %v382
          %v888 = vpop.permute.xlu0 %887
          %891 = vset.pattern.permute.xlu0 0
          %892 = vperm.xlu0 %891, %v383
          %v893 = vpop.permute.xlu0 %892
          %896 = vset.pattern.permute.xlu0 0
          %897 = vperm.xlu0 %896, %v384
          %v898 = vpop.permute.xlu0 %897
          %901 = vset.pattern.permute.xlu0 0
          %902 = vperm.xlu0 %901, %v385
          %v903 = vpop.permute.xlu0 %902
          %906 = vset.pattern.permute.xlu0 0
          %907 = vperm.xlu0 %906, %v386
          %v908 = vpop.permute.xlu0 %907
          %911 = vset.pattern.permute.xlu0 0
          %912 = vperm.xlu0 %911, %v387
          %v913 = vpop.permute.xlu0 %912
          %916 = vset.pattern.permute.xlu0 0
          %917 = vperm.xlu0 %916, %v388
          %v918 = vpop.permute.xlu0 %917
          %921 = vset.pattern.permute.xlu0 0
          %922 = vperm.xlu0 %921, %v389
          %v923 = vpop.permute.xlu0 %922
          %926 = vset.pattern.permute.xlu0 0
          %927 = vperm.xlu0 %926, %v390
          %v928 = vpop.permute.xlu0 %927
          %931 = vset.pattern.permute.xlu0 0
          %932 = vperm.xlu0 %931, %v391
          %v933 = vpop.permute.xlu0 %932
          %936 = vset.pattern.permute.xlu0 0
          %937 = vperm.xlu0 %936, %v392
          %v938 = vpop.permute.xlu0 %937
          %941 = vset.pattern.permute.xlu0 0
          %942 = vperm.xlu0 %941, %v393
          %v943 = vpop.permute.xlu0 %942
          %946 = vset.pattern.permute.xlu0 0
          %947 = vperm.xlu0 %946, %v394
          %v948 = vpop.permute.xlu0 %947
          %951 = vset.pattern.permute.xlu0 0
          %952 = vperm.xlu0 %951, %v395
          %v953 = vpop.permute.xlu0 %952
          %956 = vset.pattern.permute.xlu0 0
          %957 = vperm.xlu0 %956, %v396
          %v958 = vpop.permute.xlu0 %957
          %961 = vset.pattern.permute.xlu0 0
          %962 = vperm.xlu0 %961, %v397
          %v963 = vpop.permute.xlu0 %962
          %966 = vset.pattern.permute.xlu0 0
          %967 = vperm.xlu0 %966, %v398
          %v968 = vpop.permute.xlu0 %967
          %971 = vset.pattern.permute.xlu0 0
          %972 = vperm.xlu0 %971, %v399
          %v973 = vpop.permute.xlu0 %972
          %976 = vset.pattern.permute.xlu0 0
          %977 = vperm.xlu0 %976, %v400
          %v978 = vpop.permute.xlu0 %977
          %981 = vset.pattern.permute.xlu0 0
          %982 = vperm.xlu0 %981, %v401
          %v983 = vpop.permute.xlu0 %982
          %986 = vset.pattern.permute.xlu0 0
          %987 = vperm.xlu0 %986, %v402
          %v988 = vpop.permute.xlu0 %987
          %991 = vset.pattern.permute.xlu0 0
          %992 = vperm.xlu0 %991, %v403
          %v993 = vpop.permute.xlu0 %992
          %996 = vset.pattern.permute.xlu0 0
          %997 = vperm.xlu0 %996, %v404
          %v998 = vpop.permute.xlu0 %997
          %1001 = vset.pattern.permute.xlu0 0
          %1002 = vperm.xlu0 %1001, %v405
          %v1003 = vpop.permute.xlu0 %1002
          %1006 = vset.pattern.permute.xlu0 0
          %1007 = vperm.xlu0 %1006, %v406
          %v1008 = vpop.permute.xlu0 %1007
          %1011 = vset.pattern.permute.xlu0 0
          %1012 = vperm.xlu0 %1011, %v407
          %v1013 = vpop.permute.xlu0 %1012
          %1016 = vset.pattern.permute.xlu0 0
          %1017 = vperm.xlu0 %1016, %v408
          %v1018 = vpop.permute.xlu0 %1017
          %1021 = vset.pattern.permute.xlu0 0
          %1022 = vperm.xlu0 %1021, %v409
          %v1023 = vpop.permute.xlu0 %1022
          %1026 = vset.pattern.permute.xlu0 0
          %1027 = vperm.xlu0 %1026, %v410
          %v1028 = vpop.permute.xlu0 %1027
          %1031 = vset.pattern.permute.xlu0 0
          %1032 = vperm.xlu0 %1031, %v411
          %v1033 = vpop.permute.xlu0 %1032
          %v1035 = vmul.f32 %v878, %v749
          %v1036 = vmul.f32 %v883, %v752
          %v1037 = vmul.f32 %v888, %v757
          %v1038 = vmul.f32 %v893, %v760
          %v1039 = vmul.f32 %v898, %v765
          %v1040 = vmul.f32 %v903, %v768
          %v1041 = vmul.f32 %v908, %v773
          %v1042 = vmul.f32 %v913, %v776
          %v1043 = vmul.f32 %v918, %v781
          %v1044 = vmul.f32 %v923, %v784
          %v1045 = vmul.f32 %v928, %v789
          %v1046 = vmul.f32 %v933, %v792
          %v1047 = vmul.f32 %v938, %v797
          %v1048 = vmul.f32 %v943, %v800
          %v1049 = vmul.f32 %v948, %v805
          %v1050 = vmul.f32 %v953, %v808
          %v1051 = vmul.f32 %v958, %v813
          %v1052 = vmul.f32 %v963, %v816
          %v1053 = vmul.f32 %v968, %v821
          %v1054 = vmul.f32 %v973, %v824
          %v1055 = vmul.f32 %v978, %v829
          %v1056 = vmul.f32 %v983, %v832
          %v1057 = vmul.f32 %v988, %v837
          %v1058 = vmul.f32 %v993, %v840
          %v1059 = vmul.f32 %v998, %v845
          %v1060 = vmul.f32 %v1003, %v848
          %v1061 = vmul.f32 %v1008, %v853
          %v1062 = vmul.f32 %v1013, %v856
          %v1063 = vmul.f32 %v1018, %v861
          %v1064 = vmul.f32 %v1023, %v864
          %v1065 = vmul.f32 %v1028, %v869
          %v1066 = vmul.f32 %v1033, %v872
          %v1067 = vpack.c.bf16 %v1036, %v1035
          %v1068 = vpack.c.bf16 %v1038, %v1037
          %v1069 = vpack.c.bf16 %v1040, %v1039
          %v1070 = vpack.c.bf16 %v1042, %v1041
          %v1071 = vpack.c.bf16 %v1044, %v1043
          %v1072 = vpack.c.bf16 %v1046, %v1045
          %v1073 = vpack.c.bf16 %v1048, %v1047
          %v1074 = vpack.c.bf16 %v1050, %v1049
          %v1075 = vpack.c.bf16 %v1052, %v1051
          %v1076 = vpack.c.bf16 %v1054, %v1053
          %v1077 = vpack.c.bf16 %v1056, %v1055
          %v1078 = vpack.c.bf16 %v1058, %v1057
          %v1079 = vpack.c.bf16 %v1060, %v1059
          %v1080 = vpack.c.bf16 %v1062, %v1061
          %v1081 = vpack.c.bf16 %v1064, %v1063
          %v1082 = vpack.c.bf16 %v1066, %v1065
          %v1083 = vld [vmem:[%s334] sm:$0xff]
          %v1084 = vld [vmem:[%s334 + $0x8] sm:$0xff]
          %v1085 = vld [vmem:[%s334 + $0x10] sm:$0xff]
          %v1086 = vld [vmem:[%s334 + $0x18] sm:$0xff]
          %1087 = vmatprep.subr.bf16.mxu0 0
          %1088 = vmatpush1.bf16.msra.mxu0 %v1067
          %1089 = vmatprep.subr.bf16.mxu0 0
          %1090 = vmatpush1.bf16.msra.mxu0 %v1068
          %1091 = vmatprep.subr.bf16.mxu0 0
          %1092 = vmatpush1.bf16.msra.mxu0 %v1069
          %1093 = vmatprep.subr.bf16.mxu0 0
          %1094 = vmatpush1.bf16.msra.mxu0 %v1070
          %1095 = vmatprep.subr.bf16.mxu0 0
          %1096 = vmatpush1.bf16.msra.mxu0 %v1071
          %1097 = vmatprep.subr.bf16.mxu0 0
          %1098 = vmatpush1.bf16.msra.mxu0 %v1072
          %1099 = vmatprep.subr.bf16.mxu0 0
          %1100 = vmatpush1.bf16.msra.mxu0 %v1073
          %1101 = vmatprep.subr.bf16.mxu0 0
          %1102 = vmatpush1.bf16.msra.mxu0 %v1074
          %1103 = vmatprep.subr.bf16.mxu0 0
          %1104 = vmatpush1.bf16.msra.mxu0 %v1075
          %1105 = vmatprep.subr.bf16.mxu0 0
          %1106 = vmatpush1.bf16.msra.mxu0 %v1076
          %1107 = vmatprep.subr.bf16.mxu0 0
          %1108 = vmatpush1.bf16.msra.mxu0 %v1077
          %1109 = vmatprep.subr.bf16.mxu0 0
          %1110 = vmatpush1.bf16.msra.mxu0 %v1078
          %1111 = vmatprep.subr.bf16.mxu0 0
          %1112 = vmatpush1.bf16.msra.mxu0 %v1079
          %1113 = vmatprep.subr.bf16.mxu0 0
          %1114 = vmatpush1.bf16.msra.mxu0 %v1080
          %1115 = vmatprep.subr.bf16.mxu0 0
          %1116 = vmatpush1.bf16.msra.mxu0 %v1081
          %1117 = vmatprep.subr.bf16.mxu0 0
          %1118 = vmatpush1.bf16.msra.mxu0 %v1082
          %1119 = vmatprep.mubr.bf16.mxu0 %v445
          %1120 = vmatmul.mubr.bf16.gmra.mrb[0].mxu0 %v444
          %v1121 = vpop.f32.mrb[0].mxu0
          %v1122 = vadd.f32 0.0, %v1121
          %v1123 = vpop.f32.mrb[0].mxu0
          %v1124 = vpop.f32.mrb[0].mxu0
          %v1125 = vadd.f32 0.0, %v1124
          %v1126 = vpop.f32.mrb[0].mxu0
          %1127 = vmatprep.mubr.bf16.mxu0 %v447
          %1128 = vmatmul.mubr.bf16.gmra.mrb[0].mxu0 %v446
          %v1129 = vpop.f32.mrb[0].mxu0
          %v1130 = vadd.f32 0.0, %v1129
          %v1131 = vpop.f32.mrb[0].mxu0
          %v1132 = vpop.f32.mrb[0].mxu0
          %v1133 = vadd.f32 0.0, %v1132
          %v1134 = vpop.f32.mrb[0].mxu0
          %1135 = vdwg.mxu0
          %v1136 = vadd.f32 %v1083, %v1122
          %v1137 = vadd.f32 %v1084, %v1125
          %v1138 = vadd.f32 %v1085, %v1130
          %v1139 = vadd.f32 %v1086, %v1133
          %1140 = vst [vmem:[%s334] sm:$0xff] %v1136
          %1141 = vst [vmem:[%s334 + $0x8] sm:$0xff] %v1137
          %1142 = vst [vmem:[%s334 + $0x10] sm:$0xff] %v1138
          %1143 = vst [vmem:[%s334 + $0x18] sm:$0xff] %v1139
        $region52: #{tpu_custom_call.1} parent=39 // pred_fallthru
          _
        %p1144 = scmp.eq.s32.totalorder %s34, 1
        // Predicated region
        $region53: #{tpu_custom_call.1} parent=39 // pred_check
          %p1145 = pneg %p1144
        $region54: #{tpu_custom_call.1} parent=39 // pred_check_branch
          %1147 = sbr.rel (%p1145) target = $region56
        $region55: #{tpu_custom_call.1} parent=39 // pred_region
          %v1148 = vld [vmem:[#allocation2] sm:$0xff]
          %v1149 = vld [vmem:[#allocation2 + $0x8] sm:$0xff]
          %v1150 = vld [vmem:[#allocation2 + $0x10] sm:$0xff]
          %v1151 = vld [vmem:[#allocation2 + $0x18] sm:$0xff]
          %vm1152 = vcmp.gt.f32.partialorder %v1148, 0.0
          %vm1153 = vcmp.gt.f32.partialorder %v1149, 0.0
          %vm1154 = vcmp.gt.f32.partialorder %v1150, 0.0
          %vm1155 = vcmp.gt.f32.partialorder %v1151, 0.0
          %v1156 = vsel %vm1152, %v1148, 1.0
          %v1157 = vsel %vm1153, %v1149, 1.0
          %v1158 = vsel %vm1154, %v1150, 1.0
          %v1159 = vsel %vm1155, %v1151, 1.0
          %v1160 = vrcp.pop %v1156
          %v1161 = vrcp.pop %v1157
          %v1162 = vrcp.pop %v1158
          %v1163 = vrcp.pop %v1159
          %v1164 = vld [vmem:[%s334] sm:$0xff]
          %v1165 = vld [vmem:[%s334 + $0x8] sm:$0xff]
          %v1166 = vld [vmem:[%s334 + $0x10] sm:$0xff]
          %v1167 = vld [vmem:[%s334 + $0x18] sm:$0xff]
          %1169 = vset.pattern.permute.xlu0 0
          %1170 = vperm.xlu0 %1169, %v1160
          %v1171 = vpop.permute.xlu0 %1170
          %1174 = vset.pattern.permute.xlu0 0
          %1175 = vperm.xlu0 %1174, %v1161
          %v1176 = vpop.permute.xlu0 %1175
          %1179 = vset.pattern.permute.xlu0 0
          %1180 = vperm.xlu0 %1179, %v1162
          %v1181 = vpop.permute.xlu0 %1180
          %1184 = vset.pattern.permute.xlu0 0
          %1185 = vperm.xlu0 %1184, %v1163
          %v1186 = vpop.permute.xlu0 %1185
          %v1188 = vmul.f32 %v1164, %v1171
          %v1189 = vmul.f32 %v1165, %v1176
          %v1190 = vmul.f32 %v1166, %v1181
          %v1191 = vmul.f32 %v1167, %v1186
          %1192 = vst [vmem:[%s334] sm:$0xff] %v1188
          %1193 = vst [vmem:[%s334 + $0x8] sm:$0xff] %v1189
          %1194 = vst [vmem:[%s334 + $0x10] sm:$0xff] %v1190
          %1195 = vst [vmem:[%s334 + $0x18] sm:$0xff] %v1191
        $region56: #{tpu_custom_call.1} parent=39 // pred_fallthru
          _
        %s1196 = sand.u32 %s185, 1
        %s1197 = scalar_lea.sflag [#allocation7], %s1196
        %s1198 = sand.u32 %s185, 1
        %s1199 = smul.addr %s1198, 32
        %s1200 = scalar_lea.vmem [#allocation8], %s1199
        // Predicated region
        $region57: #{tpu_custom_call.1} parent=39 // pred_check
          %p1201 = pneg %p195
        $region58: #{tpu_custom_call.1} parent=39 // pred_check_branch
          %1203 = sbr.rel (%p1201) target = $region60
        $region59: #{tpu_custom_call.1} parent=39 // pred_region
          %s1204 = smul.u32 4, %s33
          %s1206 = ssub.s32 512, 512
          %1207 = vsyncadd %s1197, %s1206
          %s1208 = smul.addr %s1204, 128
          %s1209 = scalar_lea.hbm %s6, %s1208
          %s1210 = sshll.u32 %s1200, 4
          %s1211 = int_to_ptr.vmem [resolvable:$true] %s1210
          %1216 = dma.vmem_to_hbm [thread:$0]  %s1211, 512, %s1209, %s1197, 128, 128, 8
        $region60: #{tpu_custom_call.1} parent=39 // pred_fallthru
          _
      $region40: #{tpu_custom_call.1} parent=5 // pred_fallthru
        _
      %p1217 = scmp.le.s32.totalorder 2, %s24
      // Predicated region
      $region61: #{tpu_custom_call.1} parent=5 // pred_check
        %p1218 = pneg %p1217
      $region62: #{tpu_custom_call.1} parent=5 // pred_check_branch
        %1220 = sbr.rel (%p1218) target = $region64
      $region63: #{tpu_custom_call.1} parent=5 // pred_region
        %s1221 = ssub.s32 %s24, 2
        // Predicated region
        $region65: #{tpu_custom_call.1} parent=63 // pred_check
          %p1222 = pneg %p201
        $region66: #{tpu_custom_call.1} parent=63 // pred_check_branch
          %1224 = sbr.rel (%p1222) target = $region68
        $region67: #{tpu_custom_call.1} parent=63 // pred_region
          %s1225 = sand.u32 %s186, 1
          %s1226 = scalar_lea.sflag [#allocation7], %s1225
          %s1227 = sand.u32 %s186, 1
          %s1228 = smul.addr %s1227, 32
          %s1229 = scalar_lea.vmem [#allocation8], %s1228
          %1230 = dma.done %s1226, 512
        $region68: #{tpu_custom_call.1} parent=63 // pred_fallthru
          _
      $region64: #{tpu_custom_call.1} parent=5 // pred_fallthru
        _
    $region6: #{tpu_custom_call.1} parent=1 // loop_footer
      %s28 = sadd.s32 1, %s24
    $region7: #{tpu_custom_call.1} parent=1 // loop_footer_branch
      %23 = sbr.rel target = $region3
    $region8: #{tpu_custom_call.1} parent=1 // loop_exit
      _
    %1231 = vsyncpa [#allocation6], 1
    %s1232 = scalar_lea.sflag [#allocation6], 1
    %1233 = vsyncpa %s1232, 1
    %1234 = vsyncpa [#allocation7], 1
    %s1235 = scalar_lea.sflag [#allocation7], 1
    %1236 = vsyncpa %s1235, 1

</llo_original>
